<compile_context>
chip_gen: v6e
topology: v6e:2x2x1
jax: 0.10.0
libtpu: 0.0.40
codegen_flags: <defaults>
</compile_context>

<pallas_src>
import jax
import jax.numpy as jnp
from jax.experimental import pallas as pl
from jax.experimental.pallas import tpu as pltpu


# ---------------------------------------------------------------------------
# Kernel body (shared by the single-instance and the fused sweep versions):
# one MXU matmul over the in_features reduction axis + one VPU bias add.
# ---------------------------------------------------------------------------
def sim_linear_kernel(x_ref, wt_ref, b_ref, o_ref):
    acc = jnp.dot(x_ref[...], wt_ref[...], preferred_element_type=jnp.float32)
    o_ref[...] = (acc + b_ref[...]).astype(o_ref.dtype)


# ---------------------------------------------------------------------------
# Single-instance forward (exactly the module's forward pass).
# ---------------------------------------------------------------------------
def sim_linear(x, weight, bias):
    """x: (B, in_features) f32; weight: (out_features, in_features); bias: (out_features,)."""
    B, in_features = x.shape
    out_features = weight.shape[0]

    # One-time host-side layout prep (weights are static parameters):
    #   canonical MXU orientation (K, N) and a 2-D bias for a single vreg add.
    wt = weight.T                       # (in_features, out_features)
    b2 = bias.reshape(1, out_features)  # (1, out_features)

    vmem_spec = pl.BlockSpec(memory_space=pltpu.MemorySpace.VMEM)
    cost = pl.CostEstimate(
        flops=2 * B * in_features * out_features,
        transcendentals=0,
        bytes_accessed=4 * (B * in_features + in_features * out_features
                            + out_features + B * out_features),
    )

    # Whole-array VMEM residency, no grid -> no pipeline machinery for this
    # single tiny matmul (~14 KiB total, fits trivially on v5e/v6e/v7x).
    return pl.pallas_call(
        sim_linear_kernel,
        out_shape=jax.ShapeDtypeStruct((B, out_features), x.dtype),
        in_specs=[vmem_spec, vmem_spec, vmem_spec],
        out_specs=vmem_spec,
        cost_estimate=cost,
    )(x, wt, b2)


# ---------------------------------------------------------------------------
# Fused sweep: N SimLinear instances (e.g. fault-sweep weight variants or many
# layers sharing the same input) evaluated in ONE pallas_call.
# ---------------------------------------------------------------------------
def sim_linear_sweep(x, weights, biases, *, group=8):
    """x: (B, K) f32; weights: (N, out_features, K); biases: (N, out_features).

    Returns (B, N*out_features), where out[:, i*out_features:(i+1)*out_features]
    is instance i's SimLinear forward.
    """
    B, K = x.shape
    N, out_features, _ = weights.shape
    assert N % group == 0, "instance count must be a multiple of the group size"
    n_groups = N // group
    gN = group * out_features  # lane-dense output block width (128 for group=8, out=16)

    # One-time host-side prep of the static parameters:
    #   stack the pre-transposed weights side by side -> (K, N*out_features)
    w_big = jnp.transpose(weights, (2, 0, 1)).reshape(K, N * out_features)
    b_big = biases.reshape(1, N * out_features)

    cost = pl.CostEstimate(
        flops=2 * B * K * N * out_features,
        transcendentals=0,
        bytes_accessed=4 * (B * K + K * N * out_features
                            + N * out_features + B * N * out_features),
    )

    return pl.pallas_call(
        sim_linear_kernel,
        out_shape=jax.ShapeDtypeStruct((B, N * out_features), x.dtype),
        grid=(n_groups,),
        in_specs=[
            # x: same block every step -> stays VMEM-resident, no re-DMA.
            pl.BlockSpec((B, K), lambda g: (0, 0)),
            # per-group weight slab (K, group*out_features): the only
            # per-step HBM traffic, double-buffered by the Pallas pipeline.
            pl.BlockSpec((K, gN), lambda g: (0, g)),
            pl.BlockSpec((1, gN), lambda g: (0, g)),
        ],
        # Lane-dense output: 128-wide blocks -> unmasked vector stores.
        out_specs=pl.BlockSpec((B, gN), lambda g: (0, g)),
        compiler_params=pltpu.CompilerParams(
            dimension_semantics=("parallel",),  # shards across v7x's 2 TCs
        ),
        cost_estimate=cost,
    )(x, w_big, b_big)


if __name__ == "__main__":
    # Shapes consistent with the module: MAC array has batches=32 (so B=32),
    # size=out_features=16, multipliers=64 (so in_features<=64; use 64).
    B, in_features, out_features = 32, 64, 16
    N_INSTANCES = 16  # fused sweep size (multiple of the group of 8)

    key = jax.random.PRNGKey(0)
    kx, kw, kb, kws, kbs = jax.random.split(key, 5)

    x = jax.random.normal(kx, (B, in_features), dtype=jnp.float32)

    # Deterministic parameter init mimicking nn.Conv2d's default:
    # uniform(-1/sqrt(fan_in), 1/sqrt(fan_in)), fan_in = in_channels*kh*kw = in_features.
    bound = 1.0 / jnp.sqrt(jnp.float32(in_features))
    weight = jax.random.uniform(kw, (out_features, in_features),
                                dtype=jnp.float32, minval=-bound, maxval=bound)
    bias = jax.random.uniform(kb, (out_features,),
                              dtype=jnp.float32, minval=-bound, maxval=bound)

    # --- single-instance forward (the module's forward pass) ---
    out = sim_linear(x, weight, bias)
    out = jax.block_until_ready(out)

    ref = x @ weight.T + bias[None, :]
    assert out.shape == (B, out_features)
    assert jnp.allclose(out, ref, atol=1e-5, rtol=1e-5)

    # --- fused sweep over N weight/bias variants (amortized launch/DMA) ---
    weights = jax.random.uniform(kws, (N_INSTANCES, out_features, in_features),
                                 dtype=jnp.float32, minval=-bound, maxval=bound)
    biases = jax.random.uniform(kbs, (N_INSTANCES, out_features),
                                dtype=jnp.float32, minval=-bound, maxval=bound)

    out_sweep = sim_linear_sweep(x, weights, biases, group=8)
    out_sweep = jax.block_until_ready(out_sweep)

    ref_sweep = jnp.concatenate(
        [x @ weights[i].T + biases[i][None, :] for i in range(N_INSTANCES)], axis=1)
    assert out_sweep.shape == (B, N_INSTANCES * out_features)
    assert jnp.allclose(out_sweep, ref_sweep, atol=1e-5, rtol=1e-5)

    print("KERNEL_OK")
</pallas_src>

<mosaic_0001>
module attributes {stable_mosaic.version = 11 : i64} {
  func.func @sim_linear_kernel(%arg0: memref<32x64xf32, #tpu.memory_space<vmem>>, %arg1: memref<64x16xf32, #tpu.memory_space<vmem>>, %arg2: memref<1x16xf32, #tpu.memory_space<vmem>>, %arg3: memref<32x16xf32, #tpu.memory_space<vmem>>) attributes {dimension_semantics = [], scalar_prefetch = 0 : i64, scratch_operands = 0 : i64, tpu.core_type = #tpu.core_type<tc>} {
    %c0 = arith.constant 0 : index
    %c0_0 = arith.constant 0 : index
    %0 = vector.load %arg0[%c0, %c0_0] : memref<32x64xf32, #tpu.memory_space<vmem>>, vector<32x64xf32>
    %c0_1 = arith.constant 0 : index
    %c0_2 = arith.constant 0 : index
    %1 = vector.load %arg1[%c0_1, %c0_2] : memref<64x16xf32, #tpu.memory_space<vmem>>, vector<64x16xf32>
    %cst = arith.constant dense<0.000000e+00> : vector<32x16xf32>
    %2 = tpu.matmul %0, %1, %cst {dimension_numbers = #tpu.dot_dimension_numbers<[1], [0], [0], [1], [0, 0, 1, 1], [], []>} : vector<32x64xf32>, vector<64x16xf32>, vector<32x16xf32> -> vector<32x16xf32>
    %c0_3 = arith.constant 0 : index
    %c0_4 = arith.constant 0 : index
    %3 = vector.load %arg2[%c0_3, %c0_4] : memref<1x16xf32, #tpu.memory_space<vmem>>, vector<1x16xf32>
    %4 = vector.broadcast %3 : vector<1x16xf32> to vector<32x16xf32>
    %5 = arith.addf %2, %4 : vector<32x16xf32>
    %c0_5 = arith.constant 0 : index
    %c0_6 = arith.constant 0 : index
    %6 = vector.load %arg3[%c0_5, %c0_6] : memref<32x16xf32, #tpu.memory_space<vmem>>, vector<32x16xf32>
    tpu.vector_store %arg3[%c0_5, %c0_6], %5 {strides = array<i32>} : memref<32x16xf32, #tpu.memory_space<vmem>>, vector<32x16xf32>,
    return
  }
}

</mosaic_0001>

<llo_original>
// kernel: tpu_custom_call.1
$region0: #{tpu_custom_call.1}
  #allocation0 [shape = 'u32[]', space=smem, size = 0x4, offset = 0x4, fixed_abs, tag = 'smem constant byte address 0x4 - core index']
  #allocation1 [shape = 'u32[144,128]{1,0:T(1,128)}', space=vmem, size = 0x12000, scoped, tag = 'internal scratch']
  %s0 = inlined_call_operand.vmem [shape: f32[32,64], index: 0, kind: input, shape index: {}]
  %s1 = inlined_call_operand.vmem [shape: f32[64,16], index: 1, kind: input, shape index: {}]
  %s2 = inlined_call_operand.vmem [shape: f32[1,16], index: 2, kind: input, shape index: {}]
  %s3 = inlined_call_operand.vmem [shape: f32[32,16], index: 3, kind: output, shape index: {}]
  %s4 = sld [smem:[#allocation0]]
  $region22: #{tpu_custom_call.1} parent=0
    _
  %s6 = ssub.s32 1, %s4
  %s7 = scalar_select 0, %s6, %s4
  // Predicated region
  $region2: #{tpu_custom_call.1} parent=0 // pred_check
    _
  $region3: #{tpu_custom_call.1} parent=0 // pred_check_branch
    %9 = sbr.rel (0) target = $region5
  $region4: #{tpu_custom_call.1} parent=0 // pred_region
    _
  $region5: #{tpu_custom_call.1} parent=0 // pred_fallthru
    _
  // Predicated region
  $region6: #{tpu_custom_call.1} parent=0 // pred_check
    _
  $region7: #{tpu_custom_call.1} parent=0 // pred_check_branch
    %11 = sbr.rel (0) target = $region9
  $region8: #{tpu_custom_call.1} parent=0 // pred_region
    _
  $region9: #{tpu_custom_call.1} parent=0 // pred_fallthru
    _
  // Predicated region
  $region10: #{tpu_custom_call.1} parent=0 // pred_check
    _
  $region11: #{tpu_custom_call.1} parent=0 // pred_check_branch
    %13 = sbr.rel (0) target = $region13
  $region12: #{tpu_custom_call.1} parent=0 // pred_region
    _
  $region13: #{tpu_custom_call.1} parent=0 // pred_fallthru
    _
  %v14 = vld [vmem:[%s0] sm:$0xff]
  %v15 = vld [vmem:[%s0 + $0x8] sm:$0xff]
  %v16 = vld [vmem:[%s0 + $0x10] sm:$0xff]
  %v17 = vld [vmem:[%s0 + $0x18] sm:$0xff]
  %v18 = vld [vmem:[%s1] sm:$0xff]
  %v19 = vld [vmem:[%s1 + $0x8] sm:$0xff]
  %v20 = vld [vmem:[%s1 + $0x10] sm:$0xff]
  %v21 = vld [vmem:[%s1 + $0x18] sm:$0xff]
  %v22 = vld [vmem:[%s1 + $0x20] sm:$0xff]
  %v23 = vld [vmem:[%s1 + $0x28] sm:$0xff]
  %v24 = vld [vmem:[%s1 + $0x30] sm:$0xff]
  %v25 = vld [vmem:[%s1 + $0x38] sm:$0xff]
  %v26 = vld [vmem:[%s2] sm:$0x1]
  %v28 = vlaneseq
  %v29 = vshrl.u32 %v28, 7
  %v30 = vsub.s32 0, %v29
  %v31 = vrot.slane %v26, %v30
  %vm33 = vcmask 523264
  %v35 = vsel %vm33, %v14, 0
  %v38 = vsel %vm33, %v15, 0
  %v41 = vsel %vm33, %v16, 0
  %v44 = vsel %vm33, %v17, 0
  %46 = vmatprep.subr.mxu0 0.0
  %47 = vmatpush1.msra.mxu0 0.0
  %48 = vmatprep.subr.mxu0 0.0
  %49 = vmatpush1.msra.mxu0 0.0
  %50 = vmatprep.subr.mxu0 0.0
  %51 = vmatpush1.msra.mxu0 0.0
  %52 = vmatprep.subr.mxu0 0.0
  %53 = vmatpush1.msra.mxu0 0.0
  %54 = vmatprep.subr.mxu0 0.0
  %55 = vmatpush1.msra.mxu0 0.0
  %56 = vmatprep.subr.mxu0 0.0
  %57 = vmatpush1.msra.mxu0 0.0
  %58 = vmatprep.subr.mxu0 0.0
  %59 = vmatpush1.msra.mxu0 0.0
  %60 = vmatprep.subr.mxu0 0.0
  %61 = vmatpush1.msra.mxu0 0.0
  %62 = vmatprep.subr.mxu0 0.0
  %63 = vmatpush1.msra.mxu0 %v25
  %64 = vmatprep.subr.mxu0 0.0
  %65 = vmatpush1.msra.mxu0 %v24
  %66 = vmatprep.subr.mxu0 0.0
  %67 = vmatpush1.msra.mxu0 %v23
  %68 = vmatprep.subr.mxu0 0.0
  %69 = vmatpush1.msra.mxu0 %v22
  %70 = vmatprep.subr.mxu0 0.0
  %71 = vmatpush1.msra.mxu0 %v21
  %72 = vmatprep.subr.mxu0 0.0
  %73 = vmatpush1.msra.mxu0 %v20
  %74 = vmatprep.subr.mxu0 0.0
  %75 = vmatpush1.msra.mxu0 %v19
  %76 = vmatprep.subr.mxu0 0.0
  %77 = vmatpush1.msra.mxu0 %v18
  %78 = vmatprep.subr.mxu0 0.0
  %79 = vmatpush2.msra.mxu0 0.0
  %80 = vmatprep.subr.mxu0 0.0
  %81 = vmatpush2.msra.mxu0 0.0
  %82 = vmatprep.subr.mxu0 0.0
  %83 = vmatpush2.msra.mxu0 0.0
  %84 = vmatprep.subr.mxu0 0.0
  %85 = vmatpush2.msra.mxu0 0.0
  %86 = vmatprep.subr.mxu0 0.0
  %87 = vmatpush2.msra.mxu0 0.0
  %88 = vmatprep.subr.mxu0 0.0
  %89 = vmatpush2.msra.mxu0 0.0
  %90 = vmatprep.subr.mxu0 0.0
  %91 = vmatpush2.msra.mxu0 0.0
  %92 = vmatprep.subr.mxu0 0.0
  %93 = vmatpush2.msra.mxu0 0.0
  %94 = vmatprep.subr.mxu0 0.0
  %95 = vmatpush2.msra.mxu0 0.0
  %96 = vmatprep.subr.mxu0 0.0
  %97 = vmatpush2.msra.mxu0 0.0
  %98 = vmatprep.subr.mxu0 0.0
  %99 = vmatpush2.msra.mxu0 0.0
  %100 = vmatprep.subr.mxu0 0.0
  %101 = vmatpush2.msra.mxu0 0.0
  %102 = vmatprep.subr.mxu0 0.0
  %103 = vmatpush2.msra.mxu0 0.0
  %104 = vmatprep.subr.mxu0 0.0
  %105 = vmatpush2.msra.mxu0 0.0
  %106 = vmatprep.subr.mxu0 0.0
  %107 = vmatpush2.msra.mxu0 0.0
  %108 = vmatprep.subr.mxu0 0.0
  %109 = vmatpush2.msra.mxu0 0.0
  %110 = vmatprep.mubr.f32.mxu0 0.0
  %111 = vmatmul.mubr.f32.gmra.mxu0 %v35
  %v112 = vpop.f32.mrf.mxu0
  %v113 = vadd.f32 %v31, %v112
  %v114 = vpop.f32.mrf.mxu0
  %115 = vmatprep.mubr.f32.mxu0 0.0
  %116 = vmatmul.mubr.f32.gmra.mxu0 %v38
  %v117 = vpop.f32.mrf.mxu0
  %v118 = vadd.f32 %v31, %v117
  %v119 = vpop.f32.mrf.mxu0
  %120 = vmatprep.mubr.f32.mxu0 0.0
  %121 = vmatmul.mubr.f32.gmra.mxu0 %v41
  %v122 = vpop.f32.mrf.mxu0
  %v123 = vadd.f32 %v31, %v122
  %v124 = vpop.f32.mrf.mxu0
  %125 = vmatprep.mubr.f32.mxu0 0.0
  %126 = vmatmul.mubr.f32.gmra.mxu0 %v44
  %v127 = vpop.f32.mrf.mxu0
  %v128 = vadd.f32 %v31, %v127
  %v129 = vpop.f32.mrf.mxu0
  %130 = vdwg.mxu0
  %vm131 = vcmask 130048
  %132 = vst.msk [vmem:[%s3] sm:$0xff] %vm131, %v113
  %133 = vst.msk [vmem:[%s3 + $0x8] sm:$0xff] %vm131, %v118
  %134 = vst.msk [vmem:[%s3 + $0x10] sm:$0xff] %vm131, %v123
  %135 = vst.msk [vmem:[%s3 + $0x18] sm:$0xff] %vm131, %v128
  // Predicated region
  $region14: #{tpu_custom_call.1} parent=0 // pred_check
    _
  $region15: #{tpu_custom_call.1} parent=0 // pred_check_branch
    %137 = sbr.rel (0) target = $region17
  $region16: #{tpu_custom_call.1} parent=0 // pred_region
    _
  $region17: #{tpu_custom_call.1} parent=0 // pred_fallthru
    _
  // Predicated region
  $region18: #{tpu_custom_call.1} parent=0 // pred_check
    _
  $region19: #{tpu_custom_call.1} parent=0 // pred_check_branch
    %139 = sbr.rel (0) target = $region21
  $region20: #{tpu_custom_call.1} parent=0 // pred_region
    _
  $region21: #{tpu_custom_call.1} parent=0 // pred_fallthru
    _

</llo_original>
